<compile_context>
chip_gen: v6e
topology: v6e:2x2x1
jax: 0.10.0
libtpu: 0.0.40
codegen_flags: <defaults>
</compile_context>

<pallas_src>
import functools
import math

import jax
import jax.numpy as jnp
from jax.experimental import pallas as pl
from jax.experimental.pallas import tpu as pltpu

_LANE = 128
_MIB = 1024 * 1024
# Resident-weight budget per fused pallas_call: ~60% of v7x's 64 MiB/TC VMEM.
_WEIGHT_VMEM_BUDGET = int(0.6 * 64 * _MIB)


def _pad_up(n, m):
    return -(-n // m) * m


def _choose_tm(batch):
    """Batch tile: multiple of 16 (bf16 sublane packing), minimal padding
    waste, and >=2 grid steps for large batches (v7x megacore)."""
    b16 = _pad_up(max(batch, 1), 16)
    if b16 <= 256:
        return b16                      # single tile, minimal padding
    best_key, best_tm = None, 256
    for tm in (512, 256, 128):
        b_pad = _pad_up(batch, tm)
        if b_pad // tm < 2:             # keep both v7x TensorCores busy
            continue
        key = (b_pad - batch, -tm)      # least waste, then biggest tile
        if best_key is None or key < best_key:
            best_key, best_tm = key, tm
    return best_tm


@functools.lru_cache(maxsize=1)
def _single_buffer_weights_supported():
    """Probe whether pipeline_mode=pl.Buffered(1) on a grid-invariant input
    compiles and runs correctly; otherwise fall back to default buffering."""
    try:
        def copy_kernel(x_ref, o_ref):
            o_ref[...] = x_ref[...]

        x = jnp.arange(8 * 128, dtype=jnp.float32).reshape(8, 128)
        f = pl.pallas_call(
            copy_kernel,
            out_shape=jax.ShapeDtypeStruct((16, 128), jnp.float32),
            grid=(2,),
            in_specs=[pl.BlockSpec((8, 128), lambda i: (0, 0),
                                   pipeline_mode=pl.Buffered(1))],
            out_specs=pl.BlockSpec((8, 128), lambda i: (i, 0)),
            compiler_params=pltpu.CompilerParams(
                dimension_semantics=("parallel",)),
        )
        out = jax.block_until_ready(f(x))
        return bool(jnp.allclose(out, jnp.concatenate([x, x], axis=0)))
    except Exception:
        return False


def _make_fused_group_kernel(num_layers):
    """Kernel over refs: (x, w0, b0, ..., w{n-1}, b{n-1}, out).
    The layer loop is unrolled; activations stay in vregs/VMEM."""

    def kernel(x_ref, *args):
        o_ref = args[-1]
        wb_refs = args[:-1]
        h = x_ref[...]                                    # (tm, D0_pad) f32
        for li in range(num_layers):
            w = wb_refs[2 * li][...]                      # bf16 (Din_pad, Dout_pad)
            b = wb_refs[2 * li + 1][...]                  # f32  (1, Dout_pad)
            h = jnp.maximum(h, 0.0)                       # nn.ReLU() in f32 (VPU)
            h = jnp.dot(h.astype(jnp.bfloat16), w,        # bf16 MXU, f32 accumulate
                        preferred_element_type=jnp.float32) + b
        o_ref[...] = h.astype(o_ref.dtype)                # lane-dense store

    return kernel


def _run_group(h, layer_ids, dims_pad, prepped, tm, single_buf):
    """One fused pallas_call over a contiguous group of ReLU->Linear layers."""
    b_pad = h.shape[0]
    gdims = [dims_pad[layer_ids[0]]] + [dims_pad[li + 1] for li in layer_ids]
    n_layers = len(layer_ids)

    w_kwargs = dict(pipeline_mode=pl.Buffered(1)) if single_buf else {}
    inputs = [h]
    in_specs = [pl.BlockSpec((tm, gdims[0]), lambda i: (i, 0))]
    for k, li in enumerate(layer_ids):
        w_p, b_p = prepped[li]
        inputs += [w_p, b_p]
        in_specs += [
            pl.BlockSpec((gdims[k], gdims[k + 1]), lambda i: (0, 0), **w_kwargs),
            pl.BlockSpec((1, gdims[k + 1]), lambda i: (0, 0), **w_kwargs),
        ]
    out_spec = pl.BlockSpec((tm, gdims[-1]), lambda i: (i, 0))

    buf_count = 1 if single_buf else 2
    w_bytes = sum(gdims[k] * gdims[k + 1] * 2 + gdims[k + 1] * 4
                  for k in range(n_layers))
    act_bytes = 2 * tm * (gdims[0] + gdims[-1]) * 4          # double-buffered x/out
    live_bytes = tm * (sum(gdims) * 4 + max(gdims) * 2)      # in-flight f32 h + bf16 cast
    vmem_limit = int(1.25 * (w_bytes * buf_count + act_bytes + live_bytes))
    vmem_limit = min(max(vmem_limit, 32 * _MIB), 64 * _MIB)

    cost = pl.CostEstimate(
        flops=2 * b_pad * sum(gdims[k] * gdims[k + 1] for k in range(n_layers)),
        transcendentals=0,
        bytes_accessed=b_pad * (gdims[0] + gdims[-1]) * 4 + w_bytes,
    )

    return pl.pallas_call(
        _make_fused_group_kernel(n_layers),
        out_shape=jax.ShapeDtypeStruct((b_pad, gdims[-1]), jnp.float32),
        grid=(b_pad // tm,),
        in_specs=in_specs,
        out_specs=out_spec,
        compiler_params=pltpu.CompilerParams(
            dimension_semantics=("parallel",),
            vmem_limit_bytes=vmem_limit),
        cost_estimate=cost,
    )(*inputs)


def make_decoder(struct, params):
    """Prepare (pad / transpose / bf16-cast) the decoder parameters once and
    return a jitted forward(x) closure."""
    dims = [int(d) for d in struct]
    dims_pad = [_pad_up(d, _LANE) for d in dims]
    num_layers = len(dims) - 1
    assert len(params) == num_layers

    # One-time weight prep (hoisted out of the per-call path, cached below).
    prepped = []
    for li, (w, b) in enumerate(params):
        d_out, d_in = w.shape
        dip, dop = dims_pad[li], dims_pad[li + 1]
        w_t = (jnp.zeros((dip, dop), jnp.bfloat16)
               .at[:d_in, :d_out].set(w.T.astype(jnp.bfloat16)))
        b2 = (jnp.zeros((1, dop), jnp.float32)
              .at[0, :d_out].set(b.astype(jnp.float32)))
        prepped.append((w_t, b2))

    single_buf = _single_buffer_weights_supported()
    buf_count = 1 if single_buf else 2

    # Greedy grouping of consecutive layers under the resident-weight budget
    # (v7x fallback: a stack that fits on v5e/v6e may not fit 64 MiB/TC).
    # TODO(synk): K-tile a single oversized layer (pltpu.emit_pipeline over a
    # K grid axis with an f32 VMEM accumulator) if one layer alone exceeds
    # the budget.
    groups, cur, cur_bytes = [], [], 0
    for li in range(num_layers):
        wb = (dims_pad[li] * dims_pad[li + 1] * 2
              + dims_pad[li + 1] * 4) * buf_count
        if cur and cur_bytes + wb > _WEIGHT_VMEM_BUDGET:
            groups.append(cur)
            cur, cur_bytes = [], 0
        cur.append(li)
        cur_bytes += wb
    if cur:
        groups.append(cur)

    d0, d_last = dims[0], dims[-1]

    def forward(x):
        batch = x.shape[0]
        tm = _choose_tm(batch)
        b_pad = _pad_up(batch, tm)
        # Zero-padding is exact for a ReLU->Linear chain: padded feature
        # columns stay zero through every layer; padded batch rows are
        # independent and sliced off at the end.
        h = (jnp.zeros((b_pad, dims_pad[0]), jnp.float32)
             .at[:batch, :d0].set(x.astype(jnp.float32)))
        for g in groups:
            h = _run_group(h, g, dims_pad, prepped, tm, single_buf)
        return h[:batch, :d_last]

    return jax.jit(forward)


def init_decoder_params(struct, key):
    """Deterministic init matching nn.Linear default (kaiming-uniform-ish)."""
    params = []
    for i in range(len(struct) - 1):
        d_in, d_out = struct[i], struct[i + 1]
        key, kw, kb = jax.random.split(key, 3)
        bound = 1.0 / math.sqrt(d_in)
        w = jax.random.uniform(kw, (d_out, d_in), jnp.float32, -bound, bound)
        b = jax.random.uniform(kb, (d_out,), jnp.float32, -bound, bound)
        params.append((w, b))
    return params


def decoder_forward_ref_f32(x, params):
    """Pure-JAX f32 reference (matches the PyTorch module's math)."""
    h = x
    for (w, b) in params:
        h = jnp.maximum(h, 0.0) @ w.T + b
    return h


def decoder_forward_ref_bf16(x, params):
    """Pure-JAX reference mirroring the kernel's bf16-operand / f32-accumulate
    matmuls (for a tight numerical check of the Pallas kernel)."""
    h = x.astype(jnp.float32)
    for (w, b) in params:
        h = jnp.maximum(h, 0.0)
        h = jnp.dot(h.astype(jnp.bfloat16), w.T.astype(jnp.bfloat16),
                    preferred_element_type=jnp.float32) + b
    return h


if __name__ == "__main__":
    key = jax.random.PRNGKey(0)
    struct = [32, 64, 16]          # decoder(struct): 32 -> 64 -> 16
    batch = 8

    kx, kp = jax.random.split(key)
    x = jax.random.normal(kx, (batch, struct[0]), jnp.float32)
    params = init_decoder_params(struct, kp)

    decoder_fwd = make_decoder(struct, params)
    out = jax.block_until_ready(decoder_fwd(x))

    ref16 = decoder_forward_ref_bf16(x, params)   # kernel-precision reference
    ref32 = decoder_forward_ref_f32(x, params)    # module (f32) reference

    assert out.shape == (batch, struct[-1])
    assert jnp.allclose(out, ref16, atol=1e-4, rtol=1e-3), "mismatch vs bf16 reference"
    assert jnp.allclose(out, ref32, atol=2e-2, rtol=2e-2), "mismatch vs f32 reference"

    print("KERNEL_OK")
</pallas_src>

<mosaic_0001>
module attributes {stable_mosaic.version = 11 : i64} {
  func.func @copy_kernel(%arg0: i32, %arg1: memref<8x128xf32, #tpu.memory_space<vmem>>, %arg2: memref<8x128xf32, #tpu.memory_space<vmem>>) attributes {dimension_semantics = [#tpu.dimension_semantics<parallel>], iteration_bounds = array<i64: 2>, scalar_prefetch = 0 : i64, scratch_operands = 0 : i64, tpu.core_type = #tpu.core_type<tc>, window_params = [{pipeline_mode = #tpu.pipeline_mode<synchronous>, transform_indices = @transform_0, window_bounds = array<i64: 8, 128>}, {transform_indices = @transform_1, window_bounds = array<i64: 8, 128>}]} {
    %c0 = arith.constant 0 : index
    %c0_0 = arith.constant 0 : index
    %0 = vector.load %arg1[%c0, %c0_0] : memref<8x128xf32, #tpu.memory_space<vmem>>, vector<8x128xf32>
    %c0_1 = arith.constant 0 : index
    %c0_2 = arith.constant 0 : index
    %1 = vector.load %arg2[%c0_1, %c0_2] : memref<8x128xf32, #tpu.memory_space<vmem>>, vector<8x128xf32>
    tpu.vector_store %arg2[%c0_1, %c0_2], %0 {strides = array<i32>} : memref<8x128xf32, #tpu.memory_space<vmem>>, vector<8x128xf32>,
    return
  }
  func.func @transform_0(%arg0: i32) -> (i32, i32) {
    %c0_i32 = arith.constant 0 : i32
    %c0_i32_0 = arith.constant 0 : i32
    %c0_i32_1 = arith.constant 0 : i32
    return %c0_i32, %c0_i32_0 : i32, i32
  }
  func.func @transform_1(%arg0: i32) -> (i32, i32) {
    %c0_i32 = arith.constant 0 : i32
    %c0_i32_0 = arith.constant 0 : i32
    return %arg0, %c0_i32 : i32, i32
  }
}

module attributes {stable_mosaic.version = 11 : i64} {
  func.func @kernel(%arg0: i32, %arg1: memref<16x128xf32, #tpu.memory_space<vmem>>, %arg2: memref<128x128xbf16, #tpu.memory_space<vmem>>, %arg3: memref<1x128xf32, #tpu.memory_space<vmem>>, %arg4: memref<128x128xbf16, #tpu.memory_space<vmem>>, %arg5: memref<1x128xf32, #tpu.memory_space<vmem>>, %arg6: memref<16x128xf32, #tpu.memory_space<vmem>>) attributes {dimension_semantics = [#tpu.dimension_semantics<parallel>], iteration_bounds = array<i64: 1>, scalar_prefetch = 0 : i64, scratch_operands = 0 : i64, tpu.core_type = #tpu.core_type<tc>, window_params = [{transform_indices = @transform_0, window_bounds = array<i64: 16, 128>}, {pipeline_mode = #tpu.pipeline_mode<synchronous>, transform_indices = @transform_1, window_bounds = array<i64: 128, 128>}, {pipeline_mode = #tpu.pipeline_mode<synchronous>, transform_indices = @transform_2, window_bounds = array<i64: 1, 128>}, {pipeline_mode = #tpu.pipeline_mode<synchronous>, transform_indices = @transform_3, window_bounds = array<i64: 128, 128>}, {pipeline_mode = #tpu.pipeline_mode<synchronous>, transform_indices = @transform_4, window_bounds = array<i64: 1, 128>}, {transform_indices = @transform_5, window_bounds = array<i64: 16, 128>}]} {
    %c0 = arith.constant 0 : index
    %c0_0 = arith.constant 0 : index
    %0 = vector.load %arg1[%c0, %c0_0] : memref<16x128xf32, #tpu.memory_space<vmem>>, vector<16x128xf32>
    %c0_1 = arith.constant 0 : index
    %c0_2 = arith.constant 0 : index
    %1 = vector.load %arg2[%c0_1, %c0_2] : memref<128x128xbf16, #tpu.memory_space<vmem>>, vector<128x128xbf16>
    %c0_3 = arith.constant 0 : index
    %c0_4 = arith.constant 0 : index
    %2 = vector.load %arg3[%c0_3, %c0_4] : memref<1x128xf32, #tpu.memory_space<vmem>>, vector<1x128xf32>
    %cst = arith.constant 0.000000e+00 : f32
    %3 = vector.broadcast %cst : f32 to vector<16x128xf32>
    %4 = arith.maximumf %0, %3 : vector<16x128xf32>
    %5 = arith.truncf %4 : vector<16x128xf32> to vector<16x128xbf16>
    %cst_5 = arith.constant dense<0.000000e+00> : vector<16x128xf32>
    %6 = tpu.matmul %5, %1, %cst_5 {dimension_numbers = #tpu.dot_dimension_numbers<[1], [0], [0], [1], [0, 0, 1, 1], [], []>} : vector<16x128xbf16>, vector<128x128xbf16>, vector<16x128xf32> -> vector<16x128xf32>
    %7 = vector.broadcast %2 : vector<1x128xf32> to vector<16x128xf32>
    %8 = arith.addf %6, %7 : vector<16x128xf32>
    %c0_6 = arith.constant 0 : index
    %c0_7 = arith.constant 0 : index
    %9 = vector.load %arg4[%c0_6, %c0_7] : memref<128x128xbf16, #tpu.memory_space<vmem>>, vector<128x128xbf16>
    %c0_8 = arith.constant 0 : index
    %c0_9 = arith.constant 0 : index
    %10 = vector.load %arg5[%c0_8, %c0_9] : memref<1x128xf32, #tpu.memory_space<vmem>>, vector<1x128xf32>
    %cst_10 = arith.constant 0.000000e+00 : f32
    %11 = vector.broadcast %cst_10 : f32 to vector<16x128xf32>
    %12 = arith.maximumf %8, %11 : vector<16x128xf32>
    %13 = arith.truncf %12 : vector<16x128xf32> to vector<16x128xbf16>
    %cst_11 = arith.constant dense<0.000000e+00> : vector<16x128xf32>
    %14 = tpu.matmul %13, %9, %cst_11 {dimension_numbers = #tpu.dot_dimension_numbers<[1], [0], [0], [1], [0, 0, 1, 1], [], []>} : vector<16x128xbf16>, vector<128x128xbf16>, vector<16x128xf32> -> vector<16x128xf32>
    %15 = vector.broadcast %10 : vector<1x128xf32> to vector<16x128xf32>
    %16 = arith.addf %14, %15 : vector<16x128xf32>
    %c0_12 = arith.constant 0 : index
    %c0_13 = arith.constant 0 : index
    %17 = vector.load %arg6[%c0_12, %c0_13] : memref<16x128xf32, #tpu.memory_space<vmem>>, vector<16x128xf32>
    tpu.vector_store %arg6[%c0_12, %c0_13], %16 {strides = array<i32>} : memref<16x128xf32, #tpu.memory_space<vmem>>, vector<16x128xf32>,
    return
  }
  func.func @transform_0(%arg0: i32) -> (i32, i32) {
    %c0_i32 = arith.constant 0 : i32
    %c0_i32_0 = arith.constant 0 : i32
    return %arg0, %c0_i32 : i32, i32
  }
  func.func @transform_1(%arg0: i32) -> (i32, i32) {
    %c0_i32 = arith.constant 0 : i32
    %c0_i32_0 = arith.constant 0 : i32
    %c0_i32_1 = arith.constant 0 : i32
    return %c0_i32, %c0_i32_0 : i32, i32
  }
  func.func @transform_2(%arg0: i32) -> (i32, i32) {
    %c0_i32 = arith.constant 0 : i32
    %c0_i32_0 = arith.constant 0 : i32
    %c0_i32_1 = arith.constant 0 : i32
    return %c0_i32, %c0_i32_0 : i32, i32
  }
  func.func @transform_3(%arg0: i32) -> (i32, i32) {
    %c0_i32 = arith.constant 0 : i32
    %c0_i32_0 = arith.constant 0 : i32
    %c0_i32_1 = arith.constant 0 : i32
    return %c0_i32, %c0_i32_0 : i32, i32
  }
  func.func @transform_4(%arg0: i32) -> (i32, i32) {
    %c0_i32 = arith.constant 0 : i32
    %c0_i32_0 = arith.constant 0 : i32
    %c0_i32_1 = arith.constant 0 : i32
    return %c0_i32, %c0_i32_0 : i32, i32
  }
  func.func @transform_5(%arg0: i32) -> (i32, i32) {
    %c0_i32 = arith.constant 0 : i32
    %c0_i32_0 = arith.constant 0 : i32
    return %arg0, %c0_i32 : i32, i32
  }
}

</mosaic_0001>

<llo_original>
// kernel: tpu_custom_call.1
$region0: #{tpu_custom_call.1}
  #allocation0 [shape = 'u32[]', space=smem, size = 0x4, offset = 0x4, fixed_abs, tag = 'smem constant byte address 0x4 - core index']
  #allocation1 [shape = 'u32[144,128]{1,0:T(1,128)}', space=vmem, size = 0x12000, scoped, tag = 'internal scratch']
  %s0 = inlined_call_operand.hbm [shape: f32[8,128], index: 0, kind: input, shape index: {}]
  %s1 = inlined_call_operand.hbm [shape: f32[16,128], index: 1, kind: output, shape index: {}]
  %s2 = sld [smem:[#allocation0]]
  $region41: #{tpu_custom_call.1} parent=0
    _
  %s4 = ssub.s32 1, %s2
  %s5 = scalar_select 0, %s4, %s2
  $region1: #{tpu_custom_call.1} parent=0
    #allocation2 [shape = 'u8[4096]{0}', space=vmem, size = 0x1000, scoped, tag = 'input window, operand 0, single buffered']
    #allocation3 [shape = 's32[2]{0}', space=sflag, size = 0x8, scoped, tag = 'scoped memory for tpu_custom_call.1']
    #allocation4 [shape = 's32[2]{0}', space=sflag, size = 0x8, scoped, tag = 'scoped memory for tpu_custom_call.1']
    #allocation5 [shape = 'u8[8192]{0}', space=vmem, size = 0x2000, scoped, tag = 'output window, operand 0']
    %6 = vsyncpa [#allocation3], 0
    %7 = vsyncpa [#allocation4], 0
    %s8 = scalar_lea.sflag [#allocation4], 1
    %9 = vsyncpa %s8, 0
    loop: start=0, step=1, limit=4
    $region2: #{tpu_custom_call.1} parent=1 // loop_pre_header
      _
    $region3: #{tpu_custom_call.1} parent=1 // loop_header
      %s11 = sphi 0, %s15
      %p12 = scmp.ge.s32.totalorder %s11, 4
      %s19 = sphi 0, %s19
      %s21 = sphi 0, %s19
      %s22 = sphi 0, %s21
      %s36 = sphi 0, %s22
      %s42 = sphi 0, %s44
      %s45 = sphi 0, %s42
      %s46 = sphi 0, %s45
      %s62 = sphi 0, %s46
    $region4: #{tpu_custom_call.1} parent=1 // loop_header_branch
      %14 = sbr.rel (%p12) target = $region8
    $region5: #{tpu_custom_call.1} parent=1 // loop_body
      %s16 = ssub.s32 %s11, 1
      %s17 = ssub.s32 %s11, 2
      %s18 = sadd.s32 %s11, 1
      %s20 = sadd.s32 %s19, 1
      %p23 = scmp.eq.s32.totalorder %s11, 1
      %p24 = scmp.ne.s32.totalorder %s19, %s21
      %p25 = scmp.eq.s32.totalorder %s11, 0
      %p26 = por %p24, %p25
      %p27 = scmp.ne.s32.totalorder %s19, %s21
      %p28 = scmp.eq.s32.totalorder %s16, 1
      %p29 = por %p27, %p28
      %p30 = scmp.ne.s32.totalorder %s21, %s22
      %p31 = scmp.eq.s32.totalorder %s16, 0
      %p32 = por %p30, %p31
      %p33 = scmp.ne.s32.totalorder %s21, %s22
      %p34 = scmp.eq.s32.totalorder %s17, 1
      %p35 = por %p33, %p34
      %p37 = scmp.ne.s32.totalorder %s22, %s36
      %p38 = scmp.eq.s32.totalorder %s17, 0
      %p39 = por %p37, %p38
      %s40 = ssub.s32 %s11, %s18
      %p41 = scmp.eq.s32.totalorder %s40, 0
      %s43 = sadd.s32 %s42, 1
      %s44 = scalar_select %p41, %s42, %s43
      %p47 = pneg %p41
      %p48 = scmp.eq.s32.totalorder %s11, 1
      %p49 = por %p47, %p48
      %p50 = scmp.ne.s32.totalorder %s42, %s45
      %p51 = scmp.eq.s32.totalorder %s11, 0
      %p52 = por %p50, %p51
      %p53 = scmp.ne.s32.totalorder %s42, %s45
      %p54 = scmp.eq.s32.totalorder %s16, 1
      %p55 = por %p53, %p54
      %p56 = scmp.ne.s32.totalorder %s45, %s46
      %p57 = scmp.eq.s32.totalorder %s16, 0
      %p58 = por %p56, %p57
      %p59 = scmp.ne.s32.totalorder %s45, %s46
      %p60 = scmp.eq.s32.totalorder %s17, 1
      %p61 = por %p59, %p60
      %p63 = scmp.ne.s32.totalorder %s46, %s62
      %p64 = scmp.eq.s32.totalorder %s17, 0
      %p65 = por %p63, %p64
      %p66 = scmp.le.s32.totalorder 1, %s11
      %p67 = scmp.lt.s32.totalorder %s11, 3
      %p68 = pnand %p66, %p67
      %p69 = pneg %p68
      // Predicated region
      $region9: #{tpu_custom_call.1} parent=5 // pred_check
        _
      $region10: #{tpu_custom_call.1} parent=5 // pred_check_branch
        %71 = sbr.rel (%p68) target = $region12
      $region11: #{tpu_custom_call.1} parent=5 // pred_region
        %s72 = ssub.s32 %s11, 1
        // Predicated region
        $region13: #{tpu_custom_call.1} parent=11 // pred_check
          %p73 = pneg %p32
        $region14: #{tpu_custom_call.1} parent=11 // pred_check_branch
          %75 = sbr.rel (%p73) target = $region16
        $region15: #{tpu_custom_call.1} parent=11 // pred_region
          %s77 = ssub.s32 128, 128
          %78 = vsyncadd [#allocation3], %s77
          %s80 = sshll.u32 [#allocation2], 4
          %s81 = int_to_ptr.vmem [resolvable:$true] %s80
          %83 = dma.hbm_to_vmem [thread:$0]  %s0, 128, %s81, [#allocation3]
        $region16: #{tpu_custom_call.1} parent=11 // pred_fallthru
          _
      $region12: #{tpu_custom_call.1} parent=5 // pred_fallthru
        _
      %p84 = scmp.lt.s32.totalorder %s11, 2
      // Predicated region
      $region17: #{tpu_custom_call.1} parent=5 // pred_check
        %p85 = pneg %p84
      $region18: #{tpu_custom_call.1} parent=5 // pred_check_branch
        %87 = sbr.rel (%p85) target = $region20
      $region19: #{tpu_custom_call.1} parent=5 // pred_region
        _
      $region20: #{tpu_custom_call.1} parent=5 // pred_fallthru
        _
      %p88 = scmp.le.s32.totalorder 1, %s11
      %p89 = scmp.lt.s32.totalorder %s11, 3
      %p90 = pnand %p88, %p89
      %p91 = pneg %p90
      // Predicated region
      $region21: #{tpu_custom_call.1} parent=5 // pred_check
        _
      $region22: #{tpu_custom_call.1} parent=5 // pred_check_branch
        %93 = sbr.rel (%p90) target = $region24
      $region23: #{tpu_custom_call.1} parent=5 // pred_region
        %s94 = ssub.s32 %s11, 1
        // Predicated region
        $region25: #{tpu_custom_call.1} parent=23 // pred_check
          %p95 = pneg %p32
        $region26: #{tpu_custom_call.1} parent=23 // pred_check_branch
          %97 = sbr.rel (%p95) target = $region28
        $region27: #{tpu_custom_call.1} parent=23 // pred_region
          %98 = dma.done [#allocation3], 128
        $region28: #{tpu_custom_call.1} parent=23 // pred_fallthru
          _
        %p99 = pneg %p32
        %p100 = pneg %p29
        %p101 = pneg %p58
        %p102 = pneg %p55
        %s103 = sand.u32 %s45, 1
        %s104 = scalar_lea.sflag [#allocation4], %s103
        %s105 = sand.u32 %s45, 1
        %s106 = smul.addr %s105, 8
        %s107 = scalar_lea.vmem [#allocation5], %s106
        %v108 = vld [vmem:[#allocation2] sm:$0xff]
        %109 = vst [vmem:[%s107] sm:$0xff] %v108
        %s110 = sand.u32 %s45, 1
        %s111 = scalar_lea.sflag [#allocation4], %s110
        %s112 = sand.u32 %s45, 1
        %s113 = smul.addr %s112, 8
        %s114 = scalar_lea.vmem [#allocation5], %s113
        // Predicated region
        $region29: #{tpu_custom_call.1} parent=23 // pred_check
          %p115 = pneg %p55
        $region30: #{tpu_custom_call.1} parent=23 // pred_check_branch
          %117 = sbr.rel (%p115) target = $region32
        $region31: #{tpu_custom_call.1} parent=23 // pred_region
          %s119 = ssub.s32 128, 128
          %120 = vsyncadd %s111, %s119
          %s121 = smul.addr %s16, 128
          %s122 = scalar_lea.hbm %s1, %s121
          %s124 = sshll.u32 %s114, 4
          %s125 = int_to_ptr.vmem [resolvable:$true] %s124
          %127 = dma.vmem_to_hbm [thread:$0]  %s125, 128, %s122, %s111
        $region32: #{tpu_custom_call.1} parent=23 // pred_fallthru
          _
      $region24: #{tpu_custom_call.1} parent=5 // pred_fallthru
        _
      %p128 = scmp.le.s32.totalorder 2, %s11
      // Predicated region
      $region33: #{tpu_custom_call.1} parent=5 // pred_check
        %p129 = pneg %p128
      $region34: #{tpu_custom_call.1} parent=5 // pred_check_branch
        %131 = sbr.rel (%p129) target = $region36
      $region35: #{tpu_custom_call.1} parent=5 // pred_region
        %s132 = ssub.s32 %s11, 2
        // Predicated region
        $region37: #{tpu_custom_call.1} parent=35 // pred_check
          %p133 = pneg %p61
        $region38: #{tpu_custom_call.1} parent=35 // pred_check_branch
          %135 = sbr.rel (%p133) target = $region40
        $region39: #{tpu_custom_call.1} parent=35 // pred_region
          %s136 = sand.u32 %s46, 1
          %s137 = scalar_lea.sflag [#allocation4], %s136
          %s138 = sand.u32 %s46, 1
          %s139 = smul.addr %s138, 8
          %s140 = scalar_lea.vmem [#allocation5], %s139
          %141 = dma.done %s137, 128
        $region40: #{tpu_custom_call.1} parent=35 // pred_fallthru
          _
      $region36: #{tpu_custom_call.1} parent=5 // pred_fallthru
        _
    $region6: #{tpu_custom_call.1} parent=1 // loop_footer
      %s15 = sadd.s32 1, %s11
    $region7: #{tpu_custom_call.1} parent=1 // loop_footer_branch
      %10 = sbr.rel target = $region3
    $region8: #{tpu_custom_call.1} parent=1 // loop_exit
      _
    %142 = vsyncpa [#allocation3], 1
    %s143 = scalar_lea.sflag [#allocation3], 1
    %144 = vsyncpa %s143, 1
    %145 = vsyncpa [#allocation4], 1
    %s146 = scalar_lea.sflag [#allocation4], 1
    %147 = vsyncpa %s146, 1

// kernel: forward.1
$region0: #{forward.1}
  #allocation0 [shape = 'u32[]', space=smem, size = 0x4, offset = 0x4, fixed_abs, tag = 'smem constant byte address 0x4 - core index']
  #allocation1 [shape = 'u32[144,128]{1,0:T(1,128)}', space=vmem, size = 0x12000, scoped, tag = 'internal scratch']
  %s0 = inlined_call_operand.vmem [shape: f32[16,128], index: 0, kind: input, shape index: {}]
  %s1 = inlined_call_operand.hbm [shape: bf16[128,128], index: 1, kind: input, shape index: {}]
  %s2 = inlined_call_operand.vmem [shape: f32[1,128], index: 2, kind: input, shape index: {}]
  %s3 = inlined_call_operand.hbm [shape: bf16[128,128], index: 3, kind: input, shape index: {}]
  %s4 = inlined_call_operand.vmem [shape: f32[1,128], index: 4, kind: input, shape index: {}]
  %s5 = inlined_call_operand.vmem [shape: f32[16,128], index: 5, kind: output, shape index: {}]
  %s6 = sld [smem:[#allocation0]]
  $region38: #{forward.1} parent=0
    _
  %s8 = ssub.s32 1, %s6
  %s9 = scalar_select 0, %s8, %s6
  $region1: #{forward.1} parent=0
    #allocation2 [shape = 'u8[32768]{0}', space=vmem, size = 0x8000, scoped, tag = 'input window, operand 1, single buffered']
    #allocation3 [shape = 's32[1]{0}', space=sflag, size = 0x4, scoped, tag = 'scoped memory for forward.1']
    #allocation4 [shape = 'u8[32768]{0}', space=vmem, size = 0x8000, scoped, tag = 'input window, operand 3, single buffered']
    #allocation5 [shape = 's32[1]{0}', space=sflag, size = 0x4, scoped, tag = 'scoped memory for forward.1']
    %10 = vsyncpa [#allocation3], 0
    %11 = vsyncpa [#allocation5], 0
    // Predicated region
    $region2: #{forward.1} parent=1 // pred_check
      _
    $region3: #{forward.1} parent=1 // pred_check_branch
      %13 = sbr.rel (0) target = $region5
    $region4: #{forward.1} parent=1 // pred_region
      _
    $region5: #{forward.1} parent=1 // pred_fallthru
      _
    // Predicated region
    $region6: #{forward.1} parent=1 // pred_check
      _
    $region7: #{forward.1} parent=1 // pred_check_branch
      %15 = sbr.rel (0) target = $region9
    $region8: #{forward.1} parent=1 // pred_region
      %s17 = ssub.s32 1024, 1024
      %18 = vsyncadd [#allocation3], %s17
      %s19 = sshll.u32 [#allocation2], 4
      %s20 = int_to_ptr.vmem [resolvable:$true] %s19
      %25 = dma.hbm_to_vmem [thread:$0]  %s1, 1024, %s20, [#allocation3], 64, 64, 4
    $region9: #{forward.1} parent=1 // pred_fallthru
      _
    // Predicated region
    $region10: #{forward.1} parent=1 // pred_check
      _
    $region11: #{forward.1} parent=1 // pred_check_branch
      %27 = sbr.rel (0) target = $region13
    $region12: #{forward.1} parent=1 // pred_region
      _
    $region13: #{forward.1} parent=1 // pred_fallthru
      _
    // Predicated region
    $region14: #{forward.1} parent=1 // pred_check
      _
    $region15: #{forward.1} parent=1 // pred_check_branch
      %29 = sbr.rel (0) target = $region17
    $region16: #{forward.1} parent=1 // pred_region
      %s31 = ssub.s32 1024, 1024
      %32 = vsyncadd [#allocation5], %s31
      %s33 = sshll.u32 [#allocation4], 4
      %s34 = int_to_ptr.vmem [resolvable:$true] %s33
      %39 = dma.hbm_to_vmem [thread:$0]  %s3, 1024, %s34, [#allocation5], 64, 64, 4
    $region17: #{forward.1} parent=1 // pred_fallthru
      _
    // Predicated region
    $region18: #{forward.1} parent=1 // pred_check
      _
    $region19: #{forward.1} parent=1 // pred_check_branch
      %41 = sbr.rel (0) target = $region21
    $region20: #{forward.1} parent=1 // pred_region
      _
    $region21: #{forward.1} parent=1 // pred_fallthru
      _
    // Predicated region
    $region22: #{forward.1} parent=1 // pred_check
      _
    $region23: #{forward.1} parent=1 // pred_check_branch
      %43 = sbr.rel (0) target = $region25
    $region24: #{forward.1} parent=1 // pred_region
      %44 = dma.done [#allocation3], 1024
    $region25: #{forward.1} parent=1 // pred_fallthru
      _
    // Predicated region
    $region26: #{forward.1} parent=1 // pred_check
      _
    $region27: #{forward.1} parent=1 // pred_check_branch
      %46 = sbr.rel (0) target = $region29
    $region28: #{forward.1} parent=1 // pred_region
      %47 = dma.done [#allocation5], 1024
    $region29: #{forward.1} parent=1 // pred_fallthru
      _
    %v49 = vld [vmem:[%s0] sm:$0xff]
    %v50 = vld [vmem:[%s0 + $0x8] sm:$0xff]
    %v51 = vld [vmem:[#allocation2] sm:$0xf]
    %v52 = vld [vmem:[#allocation2 + $0x4] sm:$0xf]
    %v53 = vld [vmem:[#allocation2 + $0x8] sm:$0xf]
    %v54 = vld [vmem:[#allocation2 + $0xc] sm:$0xf]
    %v55 = vld [vmem:[#allocation2 + $0x10] sm:$0xf]
    %v56 = vld [vmem:[#allocation2 + $0x14] sm:$0xf]
    %v57 = vld [vmem:[#allocation2 + $0x18] sm:$0xf]
    %v58 = vld [vmem:[#allocation2 + $0x1c] sm:$0xf]
    %v59 = vld [vmem:[#allocation2 + $0x20] sm:$0xf]
    %v60 = vld [vmem:[#allocation2 + $0x24] sm:$0xf]
    %v61 = vld [vmem:[#allocation2 + $0x28] sm:$0xf]
    %v62 = vld [vmem:[#allocation2 + $0x2c] sm:$0xf]
    %v63 = vld [vmem:[#allocation2 + $0x30] sm:$0xf]
    %v64 = vld [vmem:[#allocation2 + $0x34] sm:$0xf]
    %v65 = vld [vmem:[#allocation2 + $0x38] sm:$0xf]
    %v66 = vld [vmem:[#allocation2 + $0x3c] sm:$0xf]
    %v67 = vld [vmem:[%s2] sm:$0x1]
    %v68 = vmax.f32 %v49, 0.0
    %v69 = vmax.f32 %v50, 0.0
    %v70 = vpack.c.bf16 %v69, %v68
    %v72 = vlaneseq
    %v73 = vshrl.u32 %v72, 7
    %v74 = vsub.s32 0, %v73
    %v75 = vrot.slane %v67, %v74
    %v93 = vunpack.c.l.b16 %v51
    %v94 = vunpack.c.l.b16 %v52
    %v95 = vunpack.c.l.b16 %v53
    %v96 = vunpack.c.l.b16 %v54
    %v97 = vunpack.c.l.b16 %v55
    %v98 = vunpack.c.l.b16 %v56
    %v99 = vunpack.c.l.b16 %v57
    %v100 = vunpack.c.l.b16 %v58
    %v101 = vunpack.c.l.b16 %v59
    %v102 = vunpack.c.l.b16 %v60
    %v103 = vunpack.c.l.b16 %v61
    %v104 = vunpack.c.l.b16 %v62
    %v105 = vunpack.c.l.b16 %v63
    %v106 = vunpack.c.l.b16 %v64
    %v107 = vunpack.c.l.b16 %v65
    %v108 = vunpack.c.l.b16 %v66
    %v109 = vpack.c.b16 %v94, %v93
    %v110 = vpack.c.b16 %v96, %v95
    %v111 = vpack.c.b16 %v98, %v97
    %v112 = vpack.c.b16 %v100, %v99
    %v113 = vpack.c.b16 %v102, %v101
    %v114 = vpack.c.b16 %v104, %v103
    %v115 = vpack.c.b16 %v106, %v105
    %v116 = vpack.c.b16 %v108, %v107
    %125 = vmatprep.subr.bf16.mxu0 0
    %126 = vmatpush1.bf16.msra.mxu0 %v116
    %127 = vmatprep.subr.bf16.mxu0 0
    %128 = vmatpush1.bf16.msra.mxu0 %v115
    %129 = vmatprep.subr.bf16.mxu0 0
    %130 = vmatpush1.bf16.msra.mxu0 %v114
    %131 = vmatprep.subr.bf16.mxu0 0
    %132 = vmatpush1.bf16.msra.mxu0 %v113
    %133 = vmatprep.subr.bf16.mxu0 0
    %134 = vmatpush1.bf16.msra.mxu0 %v112
    %135 = vmatprep.subr.bf16.mxu0 0
    %136 = vmatpush1.bf16.msra.mxu0 %v111
    %137 = vmatprep.subr.bf16.mxu0 0
    %138 = vmatpush1.bf16.msra.mxu0 %v110
    %139 = vmatprep.subr.bf16.mxu0 0
    %140 = vmatpush1.bf16.msra.mxu0 %v109
    %141 = vmatprep.subr.bf16.mxu0 0
    %142 = vmatpush2.bf16.msra.mxu0 0
    %143 = vmatprep.subr.bf16.mxu0 0
    %144 = vmatpush2.bf16.msra.mxu0 0
    %145 = vmatprep.subr.bf16.mxu0 0
    %146 = vmatpush2.bf16.msra.mxu0 0
    %147 = vmatprep.subr.bf16.mxu0 0
    %148 = vmatpush2.bf16.msra.mxu0 0
    %149 = vmatprep.subr.bf16.mxu0 0
    %150 = vmatpush2.bf16.msra.mxu0 0
    %151 = vmatprep.subr.bf16.mxu0 0
    %152 = vmatpush2.bf16.msra.mxu0 0
    %153 = vmatprep.subr.bf16.mxu0 0
    %154 = vmatpush2.bf16.msra.mxu0 0
    %155 = vmatprep.subr.bf16.mxu0 0
    %156 = vmatpush2.bf16.msra.mxu0 0
    %157 = vmatprep.mubr.bf16.mxu0 0
    %158 = vmatmul.mubr.bf16.gmra.mxu0 %v70
    %v159 = vpop.f32.mrf.mxu0
    %v160 = vadd.f32 %v75, %v159
    %v161 = vpop.f32.mrf.mxu0
    %v162 = vpop.f32.mrf.mxu0
    %v163 = vadd.f32 %v75, %v162
    %v164 = vpop.f32.mrf.mxu0
    %165 = vdwg.mxu0
    %v166 = vld [vmem:[#allocation4] sm:$0xf]
    %v167 = vld [vmem:[#allocation4 + $0x4] sm:$0xf]
    %v168 = vld [vmem:[#allocation4 + $0x8] sm:$0xf]
    %v169 = vld [vmem:[#allocation4 + $0xc] sm:$0xf]
    %v170 = vld [vmem:[#allocation4 + $0x10] sm:$0xf]
    %v171 = vld [vmem:[#allocation4 + $0x14] sm:$0xf]
    %v172 = vld [vmem:[#allocation4 + $0x18] sm:$0xf]
    %v173 = vld [vmem:[#allocation4 + $0x1c] sm:$0xf]
    %v174 = vld [vmem:[#allocation4 + $0x20] sm:$0xf]
    %v175 = vld [vmem:[#allocation4 + $0x24] sm:$0xf]
    %v176 = vld [vmem:[#allocation4 + $0x28] sm:$0xf]
    %v177 = vld [vmem:[#allocation4 + $0x2c] sm:$0xf]
    %v178 = vld [vmem:[#allocation4 + $0x30] sm:$0xf]
    %v179 = vld [vmem:[#allocation4 + $0x34] sm:$0xf]
    %v180 = vld [vmem:[#allocation4 + $0x38] sm:$0xf]
    %v181 = vld [vmem:[#allocation4 + $0x3c] sm:$0xf]
    %v182 = vld [vmem:[%s4] sm:$0x1]
    %v183 = vmax.f32 %v160, 0.0
    %v184 = vmax.f32 %v163, 0.0
    %v185 = vpack.c.bf16 %v184, %v183
    %v187 = vlaneseq
    %v188 = vshrl.u32 %v187, 7
    %v189 = vsub.s32 0, %v188
    %v190 = vrot.slane %v182, %v189
    %v208 = vunpack.c.l.b16 %v166
    %v209 = vunpack.c.l.b16 %v167
    %v210 = vunpack.c.l.b16 %v168
    %v211 = vunpack.c.l.b16 %v169
    %v212 = vunpack.c.l.b16 %v170
    %v213 = vunpack.c.l.b16 %v171
    %v214 = vunpack.c.l.b16 %v172
    %v215 = vunpack.c.l.b16 %v173
    %v216 = vunpack.c.l.b16 %v174
    %v217 = vunpack.c.l.b16 %v175
    %v218 = vunpack.c.l.b16 %v176
    %v219 = vunpack.c.l.b16 %v177
    %v220 = vunpack.c.l.b16 %v178
    %v221 = vunpack.c.l.b16 %v179
    %v222 = vunpack.c.l.b16 %v180
    %v223 = vunpack.c.l.b16 %v181
    %v224 = vpack.c.b16 %v209, %v208
    %v225 = vpack.c.b16 %v211, %v210
    %v226 = vpack.c.b16 %v213, %v212
    %v227 = vpack.c.b16 %v215, %v214
    %v228 = vpack.c.b16 %v217, %v216
    %v229 = vpack.c.b16 %v219, %v218
    %v230 = vpack.c.b16 %v221, %v220
    %v231 = vpack.c.b16 %v223, %v222
    %240 = vmatprep.subr.bf16.mxu0 0
    %241 = vmatpush1.bf16.msra.mxu0 %v231
    %242 = vmatprep.subr.bf16.mxu0 0
    %243 = vmatpush1.bf16.msra.mxu0 %v230
    %244 = vmatprep.subr.bf16.mxu0 0
    %245 = vmatpush1.bf16.msra.mxu0 %v229
    %246 = vmatprep.subr.bf16.mxu0 0
    %247 = vmatpush1.bf16.msra.mxu0 %v228
    %248 = vmatprep.subr.bf16.mxu0 0
    %249 = vmatpush1.bf16.msra.mxu0 %v227
    %250 = vmatprep.subr.bf16.mxu0 0
    %251 = vmatpush1.bf16.msra.mxu0 %v226
    %252 = vmatprep.subr.bf16.mxu0 0
    %253 = vmatpush1.bf16.msra.mxu0 %v225
    %254 = vmatprep.subr.bf16.mxu0 0
    %255 = vmatpush1.bf16.msra.mxu0 %v224
    %256 = vmatprep.subr.bf16.mxu0 0
    %257 = vmatpush2.bf16.msra.mxu0 0
    %258 = vmatprep.subr.bf16.mxu0 0
    %259 = vmatpush2.bf16.msra.mxu0 0
    %260 = vmatprep.subr.bf16.mxu0 0
    %261 = vmatpush2.bf16.msra.mxu0 0
    %262 = vmatprep.subr.bf16.mxu0 0
    %263 = vmatpush2.bf16.msra.mxu0 0
    %264 = vmatprep.subr.bf16.mxu0 0
    %265 = vmatpush2.bf16.msra.mxu0 0
    %266 = vmatprep.subr.bf16.mxu0 0
    %267 = vmatpush2.bf16.msra.mxu0 0
    %268 = vmatprep.subr.bf16.mxu0 0
    %269 = vmatpush2.bf16.msra.mxu0 0
    %270 = vmatprep.subr.bf16.mxu0 0
    %271 = vmatpush2.bf16.msra.mxu0 0
    %272 = vmatprep.mubr.bf16.mxu0 0
    %273 = vmatmul.mubr.bf16.gmra.mxu0 %v185
    %v274 = vpop.f32.mrf.mxu0
    %v275 = vadd.f32 %v190, %v274
    %v276 = vpop.f32.mrf.mxu0
    %v277 = vpop.f32.mrf.mxu0
    %v278 = vadd.f32 %v190, %v277
    %v279 = vpop.f32.mrf.mxu0
    %280 = vdwg.mxu0
    %281 = vst [vmem:[%s5] sm:$0xff] %v275
    %282 = vst [vmem:[%s5 + $0x8] sm:$0xff] %v278
    // Predicated region
    $region30: #{forward.1} parent=1 // pred_check
      _
    $region31: #{forward.1} parent=1 // pred_check_branch
      %284 = sbr.rel (0) target = $region33
    $region32: #{forward.1} parent=1 // pred_region
      _
    $region33: #{forward.1} parent=1 // pred_fallthru
      _
    // Predicated region
    $region34: #{forward.1} parent=1 // pred_check
      _
    $region35: #{forward.1} parent=1 // pred_check_branch
      %286 = sbr.rel (0) target = $region37
    $region36: #{forward.1} parent=1 // pred_region
      _
    $region37: #{forward.1} parent=1 // pred_fallthru
      _
    %287 = vsyncpa [#allocation3], 1
    %288 = vsyncpa [#allocation5], 1

</llo_original>
